<compile_context>
chip_gen: v5e
topology: v5e:2x2
jax: 0.10.0
libtpu: 0.0.40
codegen_flags: <defaults>
</compile_context>

<pallas_src>
import functools

import jax
import jax.numpy as jnp
from jax.experimental import pallas as pl
from jax.experimental.pallas import tpu as pltpu


def _round_up(x, m):
    return ((x + m - 1) // m) * m


_MAX_TILE_ROWS = 2048   # 2048x160 bf16 x (~0.64 MB) + 2048x128 f32 out (~1 MB)
                        # per buffer: far under every generation's VMEM budget
_SPLIT_ROWS = 256       # split into >=2 even tiles so both v7x TCs get work


def _tiling(n_rows):
    """Returns (tile_rows, grid_steps, padded_rows).

    Big tiles amortize the ~0.35us per-grid-step overhead; grid_steps is kept
    even so v7x's two TensorCores split the work evenly (v5e/v6e: 1 TC, no-op).
    """
    if n_rows < _SPLIT_ROWS:
        tm = _round_up(max(n_rows, 16), 16)         # bf16 sublane packing
        return tm, 1, tm
    n_steps = max(2, pl.cdiv(n_rows, _MAX_TILE_ROWS))
    n_steps = _round_up(n_steps, 2)                 # even split across 2 TCs
    tm = _round_up(pl.cdiv(n_rows, n_steps), 16)
    grid_m = pl.cdiv(n_rows, tm)
    return tm, grid_m, grid_m * tm


# ---------------------------------------------------------------------------
# Pallas kernel: fused Linear -> bias -> ReLU -> Linear -> bias, tiled over rows
# ---------------------------------------------------------------------------
def _mlp_kernel(x_ref, w1_ref, b1_ref, w2_ref, b2_ref, o_ref):
    # x_ref : (tm, 5*C)      bf16 VMEM tile (rows = up-graph nodes)
    # w1_ref: (5*C, P)       bf16, VMEM-resident (constant index_map), P % 128 == 0
    # b1_ref: (1, P)         f32
    # w2_ref: (P, P)         bf16, VMEM-resident
    # b2_ref: (1, P)         f32
    # o_ref : (tm, P)        f32, lane-dense store
    h = jnp.dot(x_ref[...], w1_ref[...], preferred_element_type=jnp.float32)
    h = jnp.maximum(h + b1_ref[...], 0.0)                   # bias + ReLU in f32
    out = jnp.dot(h.astype(w2_ref.dtype), w2_ref[...],
                  preferred_element_type=jnp.float32)
    o_ref[...] = (out + b2_ref[...]).astype(o_ref.dtype)


def concat_mlp_aggregation(x, w1p, b1p, w2p, b2p, *, tm, grid_m):
    """x: (n_pad, 5*C) bf16, already tile-padded.  Weights pre-padded/pre-cast."""
    n_pad, in_dim = x.shape
    out_pad = w1p.shape[1]

    cost = pl.CostEstimate(
        flops=2 * n_pad * (in_dim * out_pad + out_pad * out_pad),
        transcendentals=0,
        bytes_accessed=(n_pad * in_dim * 2                   # x (bf16)
                        + (in_dim + out_pad) * out_pad * 2   # w1, w2 (bf16)
                        + 2 * out_pad * 4                    # biases (f32)
                        + n_pad * out_pad * 4))              # output (f32)

    return pl.pallas_call(
        _mlp_kernel,
        out_shape=jax.ShapeDtypeStruct((n_pad, out_pad), jnp.float32),
        grid_spec=pltpu.PrefetchScalarGridSpec(
            num_scalar_prefetch=0,
            grid=(grid_m,),
            in_specs=[
                pl.BlockSpec((tm, in_dim), lambda i: (i, 0)),
                pl.BlockSpec((in_dim, out_pad), lambda i: (0, 0)),
                pl.BlockSpec((1, out_pad), lambda i: (0, 0)),
                pl.BlockSpec((out_pad, out_pad), lambda i: (0, 0)),
                pl.BlockSpec((1, out_pad), lambda i: (0, 0)),
            ],
            out_specs=pl.BlockSpec((tm, out_pad), lambda i: (i, 0)),
        ),
        compiler_params=pltpu.CompilerParams(
            dimension_semantics=("parallel",)),
        cost_estimate=cost,
    )(x, w1p, b1p, w2p, b2p)


# ---------------------------------------------------------------------------
# One-time (static) preparation, hoisted out of the per-call forward
# ---------------------------------------------------------------------------
def prepare_gather_indices(idx, dst, src, num_up_nodes, num_down_nodes):
    """Compose the scatter (new_h[idx] = h) and the DGL copy_u neighbor gather
    into a single gather table into h_aug = [h ; zero_row]:

        mailbox[d, k] = h_aug[gather_idx[d, k]]

    Edges are stable-sorted by destination once here (graph structure is
    static), so the per-call forward never runs argsort or the scatter.  Rows
    are pre-padded to the tile grid (padded rows point at the zero row), so the
    runtime path never calls jnp.pad either.
    NOTE: per-destination in-edge order follows the edge-list order; exactly 5
    in-edges per up node are assumed, as in the original module."""
    idx = jnp.asarray(idx, jnp.int32)
    dst = jnp.asarray(dst, jnp.int32)
    src = jnp.asarray(src, jnp.int32)

    order = jnp.argsort(dst, stable=True)              # group edges by dest
    src_sorted = src[order]

    # inverse of `idx`: up node -> row of h, or the appended zero row
    inv = jnp.full((num_up_nodes,), num_down_nodes, jnp.int32)
    inv = inv.at[idx].set(jnp.arange(num_down_nodes, dtype=jnp.int32))

    gidx = inv[src_sorted].reshape(num_up_nodes, 5)

    _, _, n_pad = _tiling(num_up_nodes)
    if n_pad != num_up_nodes:
        pad = jnp.full((n_pad - num_up_nodes, 5), num_down_nodes, jnp.int32)
        gidx = jnp.concatenate([gidx, pad], axis=0)
    return gidx


def prepare_weights(w1, b1, w2, b2):
    """One-time weight prep: bf16 cast for the MXU (f32 accumulation stays in
    the kernel) and zero-padding of the hidden/output width to a multiple of
    128 lanes so every matmul / bias / store is lane-dense (no masked vst).
    The padding is exact: padded b1 cols -> ReLU(0)=0, padded w2 rows are 0,
    padded b2 cols are 0, so padded output columns are identically 0.
    w1: (5*in_planes, out_planes), w2: (out_planes, out_planes)
    (torch.nn.Linear weights must be transposed to (in, out) first)."""
    in_dim, out_dim = w1.shape
    out_pad = _round_up(max(out_dim, 128), 128)
    pad = out_pad - out_dim
    w1p = jnp.pad(w1.astype(jnp.bfloat16), ((0, 0), (0, pad)))
    w2p = jnp.pad(w2.astype(jnp.bfloat16), ((0, pad), (0, pad)))
    b1p = jnp.pad(b1.reshape(1, out_dim).astype(jnp.float32), ((0, 0), (0, pad)))
    b2p = jnp.pad(b2.reshape(1, out_dim).astype(jnp.float32), ((0, 0), (0, pad)))
    return w1p, b1p, w2p, b2p


# ---------------------------------------------------------------------------
# Forward pass (per-call hot path)
# ---------------------------------------------------------------------------
@functools.partial(jax.jit, static_argnames=("num_up_nodes", "out_dim"))
def push_info_up(h, gather_idx, w1p, b1p, w2p, b2p, *, num_up_nodes, out_dim):
    """Forward of Push_info_up with precomputed gather table / weights.
    h: (num_down_nodes, in_planes) f32  ->  (num_up_nodes, out_dim) f32."""
    n_down, C = h.shape
    tm, grid_m, n_pad = _tiling(num_up_nodes)
    assert gather_idx.shape[0] == n_pad

    # Single fused XLA gather straight from h (in bf16): no new_h scatter, no
    # materialized mailbox, no separate cast/pad passes over x.
    h_aug = jnp.concatenate(
        [h.astype(jnp.bfloat16), jnp.zeros((1, C), jnp.bfloat16)], axis=0)
    x = h_aug[gather_idx.reshape(-1)].reshape(n_pad, 5 * C)
    # TODO(synk): for very large graphs the gather could be fused into the
    # Pallas kernel (VMEM-resident h_aug + per-tile index prefetch) to drop the
    # x HBM round trip; kept as one XLA gather here for lowering robustness.

    out = concat_mlp_aggregation(x, w1p, b1p, w2p, b2p, tm=tm, grid_m=grid_m)

    # Slice off tile-padding rows and lane-padding columns to match the module's
    # output; downstream code could keep the lane-dense (n_pad, 128k) slab.
    return out[:num_up_nodes, :out_dim]


if __name__ == "__main__":
    in_planes = 32
    out_planes = 64
    n_up = 128          # "up" nodes (each owns a mailbox of 5 messages)
    n_down = 96         # "down" nodes carrying features h

    key = jax.random.PRNGKey(0)
    k_h, k_idx, k_src, k_w1, k_b1, k_w2, k_b2 = jax.random.split(key, 7)

    # Down-node features and where they scatter into the up graph.
    h = jax.random.normal(k_h, (n_down, in_planes), dtype=jnp.float32)
    idx = jax.random.permutation(k_idx, n_up)[:n_down]          # new_h[idx] = h
    # Every up node receives messages from exactly 5 source neighbors.
    dst = jnp.repeat(jnp.arange(n_up, dtype=jnp.int32), 5)
    src = jax.random.randint(k_src, (n_up * 5,), 0, n_up, dtype=jnp.int32)

    # torch.nn.Linear stores weight as (out, in); the kernel uses (in, out).
    w1 = (jax.random.normal(k_w1, (out_planes, 5 * in_planes),
                            dtype=jnp.float32) * 0.05).T
    b1 = jax.random.normal(k_b1, (out_planes,), dtype=jnp.float32) * 0.05
    w2 = (jax.random.normal(k_w2, (out_planes, out_planes),
                            dtype=jnp.float32) * 0.05).T
    b2 = jax.random.normal(k_b2, (out_planes,), dtype=jnp.float32) * 0.05

    # ---- one-time static prep (hoisted out of the per-call forward) ----
    gather_idx = prepare_gather_indices(idx, dst, src, n_up, n_down)
    w1p, b1p, w2p, b2p = prepare_weights(w1, b1, w2, b2)

    out = push_info_up(h, gather_idx, w1p, b1p, w2p, b2p,
                       num_up_nodes=n_up, out_dim=out_planes)
    out = jax.block_until_ready(out)

    # Pure-JAX f32 reference (same math as the PyTorch forward).
    new_h = jnp.zeros((n_up, in_planes), jnp.float32).at[idx].set(h)
    mailbox = new_h[src].reshape(n_up, 5, in_planes)   # dst is already sorted
    x_ref = mailbox.reshape(n_up, 5 * in_planes)
    ref = jnp.maximum(x_ref @ w1 + b1, 0.0) @ w2 + b2

    assert out.shape == (n_up, out_planes)
    # bf16 MXU operands (f32 accumulation) -> looser tolerance vs the f32 ref.
    assert jnp.allclose(out, ref, atol=2e-2, rtol=2e-2), "mismatch vs reference"
    print("KERNEL_OK")
</pallas_src>

<mosaic_0001>
module attributes {stable_mosaic.version = 11 : i64} {
  func.func @_mlp_kernel(%arg0: i32, %arg1: memref<128x160xbf16, #tpu.memory_space<vmem>>, %arg2: memref<160x128xbf16, #tpu.memory_space<vmem>>, %arg3: memref<1x128xf32, #tpu.memory_space<vmem>>, %arg4: memref<128x128xbf16, #tpu.memory_space<vmem>>, %arg5: memref<1x128xf32, #tpu.memory_space<vmem>>, %arg6: memref<128x128xf32, #tpu.memory_space<vmem>>) attributes {dimension_semantics = [#tpu.dimension_semantics<parallel>], iteration_bounds = array<i64: 1>, scalar_prefetch = 0 : i64, scratch_operands = 0 : i64, tpu.core_type = #tpu.core_type<tc>, window_params = [{transform_indices = @transform_0, window_bounds = array<i64: 128, 160>}, {pipeline_mode = #tpu.pipeline_mode<synchronous>, transform_indices = @transform_1, window_bounds = array<i64: 160, 128>}, {pipeline_mode = #tpu.pipeline_mode<synchronous>, transform_indices = @transform_2, window_bounds = array<i64: 1, 128>}, {pipeline_mode = #tpu.pipeline_mode<synchronous>, transform_indices = @transform_3, window_bounds = array<i64: 128, 128>}, {pipeline_mode = #tpu.pipeline_mode<synchronous>, transform_indices = @transform_4, window_bounds = array<i64: 1, 128>}, {transform_indices = @transform_5, window_bounds = array<i64: 128, 128>}]} {
    %c0 = arith.constant 0 : index
    %c0_0 = arith.constant 0 : index
    %0 = vector.load %arg1[%c0, %c0_0] : memref<128x160xbf16, #tpu.memory_space<vmem>>, vector<128x160xbf16>
    %c0_1 = arith.constant 0 : index
    %c0_2 = arith.constant 0 : index
    %1 = vector.load %arg2[%c0_1, %c0_2] : memref<160x128xbf16, #tpu.memory_space<vmem>>, vector<160x128xbf16>
    %cst = arith.constant dense<0.000000e+00> : vector<128x128xf32>
    %2 = tpu.matmul %0, %1, %cst {dimension_numbers = #tpu.dot_dimension_numbers<[1], [0], [0], [1], [0, 0, 1, 1], [], []>} : vector<128x160xbf16>, vector<160x128xbf16>, vector<128x128xf32> -> vector<128x128xf32>
    %c0_3 = arith.constant 0 : index
    %c0_4 = arith.constant 0 : index
    %3 = vector.load %arg3[%c0_3, %c0_4] : memref<1x128xf32, #tpu.memory_space<vmem>>, vector<1x128xf32>
    %4 = vector.broadcast %3 : vector<1x128xf32> to vector<128x128xf32>
    %5 = arith.addf %2, %4 : vector<128x128xf32>
    %cst_5 = arith.constant 0.000000e+00 : f32
    %6 = vector.broadcast %cst_5 : f32 to vector<128x128xf32>
    %7 = arith.maximumf %5, %6 : vector<128x128xf32>
    %8 = arith.truncf %7 : vector<128x128xf32> to vector<128x128xbf16>
    %c0_6 = arith.constant 0 : index
    %c0_7 = arith.constant 0 : index
    %9 = vector.load %arg4[%c0_6, %c0_7] : memref<128x128xbf16, #tpu.memory_space<vmem>>, vector<128x128xbf16>
    %cst_8 = arith.constant dense<0.000000e+00> : vector<128x128xf32>
    %10 = tpu.matmul %8, %9, %cst_8 {dimension_numbers = #tpu.dot_dimension_numbers<[1], [0], [0], [1], [0, 0, 1, 1], [], []>} : vector<128x128xbf16>, vector<128x128xbf16>, vector<128x128xf32> -> vector<128x128xf32>
    %c0_9 = arith.constant 0 : index
    %c0_10 = arith.constant 0 : index
    %11 = vector.load %arg5[%c0_9, %c0_10] : memref<1x128xf32, #tpu.memory_space<vmem>>, vector<1x128xf32>
    %12 = vector.broadcast %11 : vector<1x128xf32> to vector<128x128xf32>
    %13 = arith.addf %10, %12 : vector<128x128xf32>
    %c0_11 = arith.constant 0 : index
    %c0_12 = arith.constant 0 : index
    %14 = vector.load %arg6[%c0_11, %c0_12] : memref<128x128xf32, #tpu.memory_space<vmem>>, vector<128x128xf32>
    tpu.vector_store %arg6[%c0_11, %c0_12], %13 {strides = array<i32>} : memref<128x128xf32, #tpu.memory_space<vmem>>, vector<128x128xf32>,
    return
  }
  func.func @transform_0(%arg0: i32) -> (i32, i32) {
    %c0_i32 = arith.constant 0 : i32
    %c0_i32_0 = arith.constant 0 : i32
    return %arg0, %c0_i32 : i32, i32
  }
  func.func @transform_1(%arg0: i32) -> (i32, i32) {
    %c0_i32 = arith.constant 0 : i32
    %c0_i32_0 = arith.constant 0 : i32
    %c0_i32_1 = arith.constant 0 : i32
    return %c0_i32, %c0_i32_0 : i32, i32
  }
  func.func @transform_2(%arg0: i32) -> (i32, i32) {
    %c0_i32 = arith.constant 0 : i32
    %c0_i32_0 = arith.constant 0 : i32
    %c0_i32_1 = arith.constant 0 : i32
    return %c0_i32, %c0_i32_0 : i32, i32
  }
  func.func @transform_3(%arg0: i32) -> (i32, i32) {
    %c0_i32 = arith.constant 0 : i32
    %c0_i32_0 = arith.constant 0 : i32
    %c0_i32_1 = arith.constant 0 : i32
    return %c0_i32, %c0_i32_0 : i32, i32
  }
  func.func @transform_4(%arg0: i32) -> (i32, i32) {
    %c0_i32 = arith.constant 0 : i32
    %c0_i32_0 = arith.constant 0 : i32
    %c0_i32_1 = arith.constant 0 : i32
    return %c0_i32, %c0_i32_0 : i32, i32
  }
  func.func @transform_5(%arg0: i32) -> (i32, i32) {
    %c0_i32 = arith.constant 0 : i32
    %c0_i32_0 = arith.constant 0 : i32
    return %arg0, %c0_i32 : i32, i32
  }
}

</mosaic_0001>

<llo_original>
// kernel: push_info_up.1
$region0: #{push_info_up.1}
  #allocation0 [shape = 'u32[]', space=smem, size = 0x4, offset = 0x4, fixed_abs, tag = 'smem constant byte address 0x4 - core index']
  #allocation1 [shape = 'u32[72,128]{1,0:T(1,128)}', space=vmem, size = 0x9000, scoped, tag = 'internal scratch']
  %s0 = inlined_call_operand.vmem [shape: bf16[128,160], index: 0, kind: input, shape index: {}]
  %s1 = inlined_call_operand.vmem [shape: bf16[160,128], index: 1, kind: input, shape index: {}]
  %s2 = inlined_call_operand.vmem [shape: f32[1,128], index: 2, kind: input, shape index: {}]
  %s3 = inlined_call_operand.vmem [shape: bf16[128,128], index: 3, kind: input, shape index: {}]
  %s4 = inlined_call_operand.vmem [shape: f32[1,128], index: 4, kind: input, shape index: {}]
  %s5 = inlined_call_operand.vmem [shape: f32[128,128], index: 5, kind: output, shape index: {}]
  %s6 = sld [smem:[#allocation0]]
  $region30: #{push_info_up.1} parent=0
    _
  %s8 = ssub.s32 1, %s6
  %s9 = scalar_select 0, %s8, %s6
  // Predicated region
  $region2: #{push_info_up.1} parent=0 // pred_check
    _
  $region3: #{push_info_up.1} parent=0 // pred_check_branch
    %11 = sbr.rel (0) target = $region5
  $region4: #{push_info_up.1} parent=0 // pred_region
    _
  $region5: #{push_info_up.1} parent=0 // pred_fallthru
    _
  // Predicated region
  $region6: #{push_info_up.1} parent=0 // pred_check
    _
  $region7: #{push_info_up.1} parent=0 // pred_check_branch
    %13 = sbr.rel (0) target = $region9
  $region8: #{push_info_up.1} parent=0 // pred_region
    _
  $region9: #{push_info_up.1} parent=0 // pred_fallthru
    _
  // Predicated region
  $region10: #{push_info_up.1} parent=0 // pred_check
    _
  $region11: #{push_info_up.1} parent=0 // pred_check_branch
    %15 = sbr.rel (0) target = $region13
  $region12: #{push_info_up.1} parent=0 // pred_region
    _
  $region13: #{push_info_up.1} parent=0 // pred_fallthru
    _
  // Predicated region
  $region14: #{push_info_up.1} parent=0 // pred_check
    _
  $region15: #{push_info_up.1} parent=0 // pred_check_branch
    %17 = sbr.rel (0) target = $region17
  $region16: #{push_info_up.1} parent=0 // pred_region
    _
  $region17: #{push_info_up.1} parent=0 // pred_fallthru
    _
  // Predicated region
  $region18: #{push_info_up.1} parent=0 // pred_check
    _
  $region19: #{push_info_up.1} parent=0 // pred_check_branch
    %19 = sbr.rel (0) target = $region21
  $region20: #{push_info_up.1} parent=0 // pred_region
    _
  $region21: #{push_info_up.1} parent=0 // pred_fallthru
    _
  %v21 = vld [vmem:[%s0] sm:$0xff]
  %v22 = vld [vmem:[%s0 + $0x8] sm:$0xff]
  %v23 = vld [vmem:[%s0 + $0x10] sm:$0xff]
  %v24 = vld [vmem:[%s0 + $0x18] sm:$0xff]
  %v25 = vld [vmem:[%s0 + $0x20] sm:$0xff]
  %v26 = vld [vmem:[%s0 + $0x28] sm:$0xff]
  %v27 = vld [vmem:[%s0 + $0x30] sm:$0xff]
  %v28 = vld [vmem:[%s0 + $0x38] sm:$0xff]
  %v29 = vld [vmem:[%s0 + $0x40] sm:$0xff]
  %v30 = vld [vmem:[%s0 + $0x48] sm:$0xff]
  %v31 = vld [vmem:[%s0 + $0x50] sm:$0xff]
  %v32 = vld [vmem:[%s0 + $0x58] sm:$0xff]
  %v33 = vld [vmem:[%s0 + $0x60] sm:$0xff]
  %v34 = vld [vmem:[%s0 + $0x68] sm:$0xff]
  %v35 = vld [vmem:[%s0 + $0x70] sm:$0xff]
  %v36 = vld [vmem:[%s0 + $0x78] sm:$0xff]
  %v37 = vld [vmem:[%s1] sm:$0xf]
  %v38 = vld [vmem:[%s1 + $0x4] sm:$0xf]
  %v39 = vld [vmem:[%s1 + $0x8] sm:$0xf]
  %v40 = vld [vmem:[%s1 + $0xc] sm:$0xf]
  %v41 = vld [vmem:[%s1 + $0x10] sm:$0xf]
  %v42 = vld [vmem:[%s1 + $0x14] sm:$0xf]
  %v43 = vld [vmem:[%s1 + $0x18] sm:$0xf]
  %v44 = vld [vmem:[%s1 + $0x1c] sm:$0xf]
  %v45 = vld [vmem:[%s1 + $0x20] sm:$0xf]
  %v46 = vld [vmem:[%s1 + $0x24] sm:$0xf]
  %v47 = vld [vmem:[%s1 + $0x28] sm:$0xf]
  %v48 = vld [vmem:[%s1 + $0x2c] sm:$0xf]
  %v49 = vld [vmem:[%s1 + $0x30] sm:$0xf]
  %v50 = vld [vmem:[%s1 + $0x34] sm:$0xf]
  %v51 = vld [vmem:[%s1 + $0x38] sm:$0xf]
  %v52 = vld [vmem:[%s1 + $0x3c] sm:$0xf]
  %v53 = vld [vmem:[%s1 + $0x40] sm:$0xf]
  %v54 = vld [vmem:[%s1 + $0x44] sm:$0xf]
  %v55 = vld [vmem:[%s1 + $0x48] sm:$0xf]
  %v56 = vld [vmem:[%s1 + $0x4c] sm:$0xf]
  %v57 = vld [vmem:[%s2] sm:$0x1]
  %v59 = vperm.slane %v57, 0
  %v77 = vunpack.c.l.b16 %v21
  %v78 = vunpack.c.h.b16 %v21
  %v79 = vunpack.c.l.b16 %v22
  %v80 = vunpack.c.h.b16 %v22
  %v81 = vunpack.c.l.b16 %v23
  %v82 = vunpack.c.h.b16 %v23
  %v83 = vunpack.c.l.b16 %v24
  %v84 = vunpack.c.h.b16 %v24
  %v85 = vunpack.c.l.b16 %v25
  %v86 = vunpack.c.h.b16 %v25
  %v87 = vunpack.c.l.b16 %v26
  %v88 = vunpack.c.h.b16 %v26
  %v89 = vunpack.c.l.b16 %v27
  %v90 = vunpack.c.h.b16 %v27
  %v91 = vunpack.c.l.b16 %v28
  %v92 = vunpack.c.h.b16 %v28
  %v93 = vunpack.c.l.b16 %v29
  %v94 = vunpack.c.h.b16 %v29
  %v95 = vunpack.c.l.b16 %v30
  %v96 = vunpack.c.h.b16 %v30
  %v97 = vunpack.c.l.b16 %v31
  %v98 = vunpack.c.h.b16 %v31
  %v99 = vunpack.c.l.b16 %v32
  %v100 = vunpack.c.h.b16 %v32
  %v101 = vunpack.c.l.b16 %v33
  %v102 = vunpack.c.h.b16 %v33
  %v103 = vunpack.c.l.b16 %v34
  %v104 = vunpack.c.h.b16 %v34
  %v105 = vunpack.c.l.b16 %v35
  %v106 = vunpack.c.h.b16 %v35
  %v107 = vunpack.c.l.b16 %v36
  %v108 = vunpack.c.h.b16 %v36
  %v109 = vpack.c.b16 %v79, %v77
  %v110 = vpack.c.b16 %v80, %v78
  %v111 = vpack.c.b16 %v83, %v81
  %v112 = vpack.c.b16 %v84, %v82
  %v113 = vpack.c.b16 %v87, %v85
  %v114 = vpack.c.b16 %v88, %v86
  %v115 = vpack.c.b16 %v91, %v89
  %v116 = vpack.c.b16 %v92, %v90
  %v117 = vpack.c.b16 %v95, %v93
  %v118 = vpack.c.b16 %v96, %v94
  %v119 = vpack.c.b16 %v99, %v97
  %v120 = vpack.c.b16 %v100, %v98
  %v121 = vpack.c.b16 %v103, %v101
  %v122 = vpack.c.b16 %v104, %v102
  %v123 = vpack.c.b16 %v107, %v105
  %v124 = vpack.c.b16 %v108, %v106
  %v153 = vunpack.c.l.b16 %v37
  %v154 = vunpack.c.l.b16 %v38
  %v155 = vunpack.c.l.b16 %v39
  %v156 = vunpack.c.l.b16 %v40
  %v157 = vunpack.c.l.b16 %v41
  %v158 = vunpack.c.l.b16 %v42
  %v159 = vunpack.c.l.b16 %v43
  %v160 = vunpack.c.l.b16 %v44
  %v161 = vunpack.c.l.b16 %v45
  %v162 = vunpack.c.l.b16 %v46
  %v163 = vunpack.c.l.b16 %v47
  %v164 = vunpack.c.l.b16 %v48
  %v165 = vunpack.c.l.b16 %v49
  %v166 = vunpack.c.l.b16 %v50
  %v167 = vunpack.c.l.b16 %v51
  %v168 = vunpack.c.l.b16 %v52
  %v169 = vunpack.c.l.b16 %v53
  %v170 = vunpack.c.l.b16 %v54
  %v171 = vunpack.c.l.b16 %v55
  %v172 = vunpack.c.l.b16 %v56
  %v173 = vpack.c.b16 %v154, %v153
  %v174 = vpack.c.b16 %v156, %v155
  %v175 = vpack.c.b16 %v158, %v157
  %v176 = vpack.c.b16 %v160, %v159
  %v177 = vpack.c.b16 %v162, %v161
  %v178 = vpack.c.b16 %v164, %v163
  %v179 = vpack.c.b16 %v166, %v165
  %v180 = vpack.c.b16 %v168, %v167
  %v181 = vpack.c.b16 %v170, %v169
  %v182 = vpack.c.b16 %v172, %v171
  %vm193 = vcmask 261120
  %v195 = vsel %vm193, %v110, 0
  %v198 = vsel %vm193, %v112, 0
  %v201 = vsel %vm193, %v114, 0
  %v204 = vsel %vm193, %v116, 0
  %v207 = vsel %vm193, %v118, 0
  %v210 = vsel %vm193, %v120, 0
  %v213 = vsel %vm193, %v122, 0
  %v216 = vsel %vm193, %v124, 0
  %218 = vmatpush.bf16.msra.mxu0 %v180
  %219 = vmatpush.bf16.msra.mxu0 %v179
  %220 = vmatpush.bf16.msra.mxu0 %v178
  %221 = vmatpush.bf16.msra.mxu0 %v177
  %222 = vmatpush.bf16.msra.mxu0 %v176
  %223 = vmatpush.bf16.msra.mxu0 %v175
  %224 = vmatpush.bf16.msra.mxu0 %v174
  %225 = vmatpush.bf16.msra.mxu0 %v173
  %226 = vmatmul.bf16.gmra.mxu0 %v109
  %v227 = vpop.f32.mrf.mxu0
  %v228 = vadd.f32 %v59, %v227
  %v229 = vpop.f32.mrf.mxu0
  %v230 = vadd.f32 %v59, %v229
  %231 = vmatmul.bf16.gmra.mxu0 %v111
  %v232 = vpop.f32.mrf.mxu0
  %v233 = vadd.f32 %v59, %v232
  %v234 = vpop.f32.mrf.mxu0
  %v235 = vadd.f32 %v59, %v234
  %236 = vmatmul.bf16.gmra.mxu0 %v113
  %v237 = vpop.f32.mrf.mxu0
  %v238 = vadd.f32 %v59, %v237
  %v239 = vpop.f32.mrf.mxu0
  %v240 = vadd.f32 %v59, %v239
  %241 = vmatmul.bf16.gmra.mxu0 %v115
  %v242 = vpop.f32.mrf.mxu0
  %v243 = vadd.f32 %v59, %v242
  %v244 = vpop.f32.mrf.mxu0
  %v245 = vadd.f32 %v59, %v244
  %246 = vmatmul.bf16.gmra.mxu0 %v117
  %v247 = vpop.f32.mrf.mxu0
  %v248 = vadd.f32 %v59, %v247
  %v249 = vpop.f32.mrf.mxu0
  %v250 = vadd.f32 %v59, %v249
  %251 = vmatmul.bf16.gmra.mxu0 %v119
  %v252 = vpop.f32.mrf.mxu0
  %v253 = vadd.f32 %v59, %v252
  %v254 = vpop.f32.mrf.mxu0
  %v255 = vadd.f32 %v59, %v254
  %256 = vmatmul.bf16.gmra.mxu0 %v121
  %v257 = vpop.f32.mrf.mxu0
  %v258 = vadd.f32 %v59, %v257
  %v259 = vpop.f32.mrf.mxu0
  %v260 = vadd.f32 %v59, %v259
  %261 = vmatmul.bf16.gmra.mxu0 %v123
  %v262 = vpop.f32.mrf.mxu0
  %v263 = vadd.f32 %v59, %v262
  %v264 = vpop.f32.mrf.mxu0
  %v265 = vadd.f32 %v59, %v264
  %266 = vdwg.mxu0
  %267 = vmatpush.bf16.msra.mxu0 0
  %268 = vmatpush.bf16.msra.mxu0 0
  %269 = vmatpush.bf16.msra.mxu0 0
  %270 = vmatpush.bf16.msra.mxu0 0
  %271 = vmatpush.bf16.msra.mxu0 0
  %272 = vmatpush.bf16.msra.mxu0 0
  %273 = vmatpush.bf16.msra.mxu0 %v182
  %274 = vmatpush.bf16.msra.mxu0 %v181
  %275 = vmatmul.bf16.gmra.mxu0 %v195
  %v276 = vpop.f32.mrf.mxu0
  %v277 = vadd.f32 %v228, %v276
  %v278 = vpop.f32.mrf.mxu0
  %v279 = vadd.f32 %v230, %v278
  %280 = vmatmul.bf16.gmra.mxu0 %v198
  %v281 = vpop.f32.mrf.mxu0
  %v282 = vadd.f32 %v233, %v281
  %v283 = vpop.f32.mrf.mxu0
  %v284 = vadd.f32 %v235, %v283
  %285 = vmatmul.bf16.gmra.mxu0 %v201
  %v286 = vpop.f32.mrf.mxu0
  %v287 = vadd.f32 %v238, %v286
  %v288 = vpop.f32.mrf.mxu0
  %v289 = vadd.f32 %v240, %v288
  %290 = vmatmul.bf16.gmra.mxu0 %v204
  %v291 = vpop.f32.mrf.mxu0
  %v292 = vadd.f32 %v243, %v291
  %v293 = vpop.f32.mrf.mxu0
  %v294 = vadd.f32 %v245, %v293
  %295 = vmatmul.bf16.gmra.mxu0 %v207
  %v296 = vpop.f32.mrf.mxu0
  %v297 = vadd.f32 %v248, %v296
  %v298 = vpop.f32.mrf.mxu0
  %v299 = vadd.f32 %v250, %v298
  %300 = vmatmul.bf16.gmra.mxu0 %v210
  %v301 = vpop.f32.mrf.mxu0
  %v302 = vadd.f32 %v253, %v301
  %v303 = vpop.f32.mrf.mxu0
  %v304 = vadd.f32 %v255, %v303
  %305 = vmatmul.bf16.gmra.mxu0 %v213
  %v306 = vpop.f32.mrf.mxu0
  %v307 = vadd.f32 %v258, %v306
  %v308 = vpop.f32.mrf.mxu0
  %v309 = vadd.f32 %v260, %v308
  %310 = vmatmul.bf16.gmra.mxu0 %v216
  %v311 = vpop.f32.mrf.mxu0
  %v312 = vadd.f32 %v263, %v311
  %v313 = vpop.f32.mrf.mxu0
  %v314 = vadd.f32 %v265, %v313
  %315 = vdwg.mxu0
  %v316 = vmax.f32 %v277, 0.0
  %v317 = vmax.f32 %v279, 0.0
  %v318 = vmax.f32 %v282, 0.0
  %v319 = vmax.f32 %v284, 0.0
  %v320 = vmax.f32 %v287, 0.0
  %v321 = vmax.f32 %v289, 0.0
  %v322 = vmax.f32 %v292, 0.0
  %v323 = vmax.f32 %v294, 0.0
  %v324 = vmax.f32 %v297, 0.0
  %v325 = vmax.f32 %v299, 0.0
  %v326 = vmax.f32 %v302, 0.0
  %v327 = vmax.f32 %v304, 0.0
  %v328 = vmax.f32 %v307, 0.0
  %v329 = vmax.f32 %v309, 0.0
  %v330 = vmax.f32 %v312, 0.0
  %v331 = vmax.f32 %v314, 0.0
  %v332 = vpack.c.bf16 %v317, %v316
  %v333 = vpack.c.bf16 %v319, %v318
  %v334 = vpack.c.bf16 %v321, %v320
  %v335 = vpack.c.bf16 %v323, %v322
  %v336 = vpack.c.bf16 %v325, %v324
  %v337 = vpack.c.bf16 %v327, %v326
  %v338 = vpack.c.bf16 %v329, %v328
  %v339 = vpack.c.bf16 %v331, %v330
  %v340 = vld [vmem:[%s3] sm:$0xf]
  %v341 = vld [vmem:[%s3 + $0x4] sm:$0xf]
  %v342 = vld [vmem:[%s3 + $0x8] sm:$0xf]
  %v343 = vld [vmem:[%s3 + $0xc] sm:$0xf]
  %v344 = vld [vmem:[%s3 + $0x10] sm:$0xf]
  %v345 = vld [vmem:[%s3 + $0x14] sm:$0xf]
  %v346 = vld [vmem:[%s3 + $0x18] sm:$0xf]
  %v347 = vld [vmem:[%s3 + $0x1c] sm:$0xf]
  %v348 = vld [vmem:[%s3 + $0x20] sm:$0xf]
  %v349 = vld [vmem:[%s3 + $0x24] sm:$0xf]
  %v350 = vld [vmem:[%s3 + $0x28] sm:$0xf]
  %v351 = vld [vmem:[%s3 + $0x2c] sm:$0xf]
  %v352 = vld [vmem:[%s3 + $0x30] sm:$0xf]
  %v353 = vld [vmem:[%s3 + $0x34] sm:$0xf]
  %v354 = vld [vmem:[%s3 + $0x38] sm:$0xf]
  %v355 = vld [vmem:[%s3 + $0x3c] sm:$0xf]
  %v356 = vld [vmem:[%s4] sm:$0x1]
  %v358 = vperm.slane %v356, 0
  %v376 = vunpack.c.l.b16 %v340
  %v377 = vunpack.c.l.b16 %v341
  %v378 = vunpack.c.l.b16 %v342
  %v379 = vunpack.c.l.b16 %v343
  %v380 = vunpack.c.l.b16 %v344
  %v381 = vunpack.c.l.b16 %v345
  %v382 = vunpack.c.l.b16 %v346
  %v383 = vunpack.c.l.b16 %v347
  %v384 = vunpack.c.l.b16 %v348
  %v385 = vunpack.c.l.b16 %v349
  %v386 = vunpack.c.l.b16 %v350
  %v387 = vunpack.c.l.b16 %v351
  %v388 = vunpack.c.l.b16 %v352
  %v389 = vunpack.c.l.b16 %v353
  %v390 = vunpack.c.l.b16 %v354
  %v391 = vunpack.c.l.b16 %v355
  %v392 = vpack.c.b16 %v377, %v376
  %v393 = vpack.c.b16 %v379, %v378
  %v394 = vpack.c.b16 %v381, %v380
  %v395 = vpack.c.b16 %v383, %v382
  %v396 = vpack.c.b16 %v385, %v384
  %v397 = vpack.c.b16 %v387, %v386
  %v398 = vpack.c.b16 %v389, %v388
  %v399 = vpack.c.b16 %v391, %v390
  %408 = vmatpush.bf16.msra.mxu0 %v399
  %409 = vmatpush.bf16.msra.mxu0 %v398
  %410 = vmatpush.bf16.msra.mxu0 %v397
  %411 = vmatpush.bf16.msra.mxu0 %v396
  %412 = vmatpush.bf16.msra.mxu0 %v395
  %413 = vmatpush.bf16.msra.mxu0 %v394
  %414 = vmatpush.bf16.msra.mxu0 %v393
  %415 = vmatpush.bf16.msra.mxu0 %v392
  %416 = vmatmul.bf16.gmra.mxu0 %v332
  %v417 = vpop.f32.mrf.mxu0
  %v418 = vadd.f32 %v358, %v417
  %v419 = vpop.f32.mrf.mxu0
  %v420 = vadd.f32 %v358, %v419
  %421 = vmatmul.bf16.gmra.mxu0 %v333
  %v422 = vpop.f32.mrf.mxu0
  %v423 = vadd.f32 %v358, %v422
  %v424 = vpop.f32.mrf.mxu0
  %v425 = vadd.f32 %v358, %v424
  %426 = vmatmul.bf16.gmra.mxu0 %v334
  %v427 = vpop.f32.mrf.mxu0
  %v428 = vadd.f32 %v358, %v427
  %v429 = vpop.f32.mrf.mxu0
  %v430 = vadd.f32 %v358, %v429
  %431 = vmatmul.bf16.gmra.mxu0 %v335
  %v432 = vpop.f32.mrf.mxu0
  %v433 = vadd.f32 %v358, %v432
  %v434 = vpop.f32.mrf.mxu0
  %v435 = vadd.f32 %v358, %v434
  %436 = vmatmul.bf16.gmra.mxu0 %v336
  %v437 = vpop.f32.mrf.mxu0
  %v438 = vadd.f32 %v358, %v437
  %v439 = vpop.f32.mrf.mxu0
  %v440 = vadd.f32 %v358, %v439
  %441 = vmatmul.bf16.gmra.mxu0 %v337
  %v442 = vpop.f32.mrf.mxu0
  %v443 = vadd.f32 %v358, %v442
  %v444 = vpop.f32.mrf.mxu0
  %v445 = vadd.f32 %v358, %v444
  %446 = vmatmul.bf16.gmra.mxu0 %v338
  %v447 = vpop.f32.mrf.mxu0
  %v448 = vadd.f32 %v358, %v447
  %v449 = vpop.f32.mrf.mxu0
  %v450 = vadd.f32 %v358, %v449
  %451 = vmatmul.bf16.gmra.mxu0 %v339
  %v452 = vpop.f32.mrf.mxu0
  %v453 = vadd.f32 %v358, %v452
  %v454 = vpop.f32.mrf.mxu0
  %v455 = vadd.f32 %v358, %v454
  %456 = vdwg.mxu0
  %457 = vst [vmem:[%s5] sm:$0xff] %v418
  %458 = vst [vmem:[%s5 + $0x8] sm:$0xff] %v420
  %459 = vst [vmem:[%s5 + $0x10] sm:$0xff] %v423
  %460 = vst [vmem:[%s5 + $0x18] sm:$0xff] %v425
  %461 = vst [vmem:[%s5 + $0x20] sm:$0xff] %v428
  %462 = vst [vmem:[%s5 + $0x28] sm:$0xff] %v430
  %463 = vst [vmem:[%s5 + $0x30] sm:$0xff] %v433
  %464 = vst [vmem:[%s5 + $0x38] sm:$0xff] %v435
  %465 = vst [vmem:[%s5 + $0x40] sm:$0xff] %v438
  %466 = vst [vmem:[%s5 + $0x48] sm:$0xff] %v440
  %467 = vst [vmem:[%s5 + $0x50] sm:$0xff] %v443
  %468 = vst [vmem:[%s5 + $0x58] sm:$0xff] %v445
  %469 = vst [vmem:[%s5 + $0x60] sm:$0xff] %v448
  %470 = vst [vmem:[%s5 + $0x68] sm:$0xff] %v450
  %471 = vst [vmem:[%s5 + $0x70] sm:$0xff] %v453
  %472 = vst [vmem:[%s5 + $0x78] sm:$0xff] %v455
  // Predicated region
  $region22: #{push_info_up.1} parent=0 // pred_check
    _
  $region23: #{push_info_up.1} parent=0 // pred_check_branch
    %474 = sbr.rel (0) target = $region25
  $region24: #{push_info_up.1} parent=0 // pred_region
    _
  $region25: #{push_info_up.1} parent=0 // pred_fallthru
    _
  // Predicated region
  $region26: #{push_info_up.1} parent=0 // pred_check
    _
  $region27: #{push_info_up.1} parent=0 // pred_check_branch
    %476 = sbr.rel (0) target = $region29
  $region28: #{push_info_up.1} parent=0 // pred_region
    _
  $region29: #{push_info_up.1} parent=0 // pred_fallthru
    _

</llo_original>
